<compile_context>
chip_gen: v5e
topology: v5e:2x2
jax: 0.10.0
libtpu: 0.0.40
codegen_flags: <defaults>
</compile_context>

<pallas_src>
import math

import jax
import jax.numpy as jnp
from jax.experimental import pallas as pl
from jax.experimental.pallas import tpu as pltpu


def critic_kernel(x_ref, a_ref, w11_ref, w12_ref, b1_ref, w2_ref, b2_ref,
                  w3_ref, b3_ref, out_ref):
    # Layer 1: two small MXU matmuls (state path + action path), biases fused.
    h1 = (jnp.dot(x_ref[...], w11_ref[...], preferred_element_type=jnp.float32)
          + jnp.dot(a_ref[...], w12_ref[...], preferred_element_type=jnp.float32)
          + b1_ref[...])
    h1 = jnp.maximum(h1, 0.0)

    # Layer 2.
    h2 = jnp.maximum(
        jnp.dot(h1, w2_ref[...], preferred_element_type=jnp.float32) + b2_ref[...],
        0.0)

    # Layer 3 (out_features == 1): VPU multiply + XLU lane reduction.
    # b3 comes from SMEM as a scalar.
    val = jnp.sum(h2 * w3_ref[...], axis=-1, keepdims=True) + b3_ref[0, 0]  # (TB, 1)

    # Single cheap relayout to lane-major (1, TB) so the output store/DMA is a
    # small contiguous unmasked slab (4 B per row of true output).
    out_ref[...] = val.reshape(out_ref.shape)


def prepare_params(params):
    """One-time parameter preparation (call once, NOT per forward step)."""
    (w11, b11, w12, b12, w2, b2, w3, b3) = params
    b1 = jnp.reshape(b11 + b12, (1, -1))        # fused layer-1 bias (1, H1)
    b2r = jnp.reshape(b2, (1, -1))              # (1, H2)
    w3_row = jnp.reshape(w3, (1, -1))           # (1, H2)
    b3_2d = jnp.reshape(b3, (1, 1)).astype(jnp.float32)  # SMEM scalar
    return (w11, w12, b1, w2, b2r, w3_row, b3_2d)


def _round_up(n, m):
    return ((n + m - 1) // m) * m


def _pick_batch_tile(batch, desired):
    """Multiple of 128; for large batches keep >= 2 grid tiles so the
    'parallel' batch axis can shard across v7x's two TensorCores."""
    half = _round_up(max(1, -(-batch // 2)), 128)   # round_up(cdiv(batch,2),128)
    return max(128, min(desired, half))


def critic_forward(x, a, prepared, *, batch_tile=512):
    """Run the Critic forward pass with one pallas_call.

    Weights/biases stay VMEM-resident across batch tiles (constant index_maps);
    only x/a activations and the narrow output row are streamed per grid step.
    """
    (w11, w12, b1, w2, b2, w3_row, b3_2d) = prepared
    batch, nb_states = x.shape
    nb_actions = a.shape[1]
    h1 = w11.shape[1]
    h2 = w2.shape[1]

    tile = _pick_batch_tile(batch, batch_tile)
    n_tiles = pl.cdiv(batch, tile)
    batch_pad = n_tiles * tile
    if batch_pad != batch:
        # Zero-padded tail rows flow through the net and are sliced off below;
        # they are never written past the true output extent after the slice.
        pad = batch_pad - batch
        x = jnp.pad(x, ((0, pad), (0, 0)))
        a = jnp.pad(a, ((0, pad), (0, 0)))

    const = lambda i: (0, 0)

    out = pl.pallas_call(
        critic_kernel,
        out_shape=jax.ShapeDtypeStruct((1, batch_pad), jnp.float32),
        grid=(n_tiles,),
        in_specs=[
            pl.BlockSpec((tile, nb_states), lambda i: (i, 0)),   # x (batch tiled)
            pl.BlockSpec((tile, nb_actions), lambda i: (i, 0)),  # a (batch tiled)
            pl.BlockSpec((nb_states, h1), const),                # W11 (resident)
            pl.BlockSpec((nb_actions, h1), const),               # W12 (resident)
            pl.BlockSpec((1, h1), const),                        # b1 = b11 + b12
            pl.BlockSpec((h1, h2), const),                       # W2
            pl.BlockSpec((1, h2), const),                        # b2
            pl.BlockSpec((1, h2), const),                        # W3 row
            pl.BlockSpec(memory_space=pltpu.MemorySpace.SMEM),   # b3 scalar
        ],
        out_specs=pl.BlockSpec((1, tile), lambda i: (0, i)),     # lane-major row
        compiler_params=pltpu.CompilerParams(
            dimension_semantics=("parallel",)),                  # v7x: 2 TCs
    )(x, a, w11, w12, b1, w2, b2, w3_row, b3_2d)

    # Lane-major (1, batch_pad) -> module's (batch, 1) output.
    return out[0, :batch, None]


def init_linear(key, fan_in, fan_out):
    """Mimics torch.nn.Linear default init (U(-k, k), k=1/sqrt(fan_in)).

    Weight returned in (in, out) layout, bias as (1, out)."""
    kw, kb = jax.random.split(key)
    bound = 1.0 / math.sqrt(fan_in)
    w = jax.random.uniform(kw, (fan_in, fan_out), jnp.float32, -bound, bound)
    b = jax.random.uniform(kb, (1, fan_out), jnp.float32, -bound, bound)
    return w, b


def reference_forward(x, a, params):
    (w11, b11, w12, b12, w2, b2, w3, b3) = params
    h1 = jnp.maximum(x @ w11 + b11 + a @ w12 + b12, 0.0)
    h2 = jnp.maximum(h1 @ w2 + b2, 0.0)
    return h2 @ w3 + b3


if __name__ == "__main__":
    # Small shapes consistent with Critic(nb_states, nb_actions, hidden1, hidden2)
    batch = 2
    nb_states = 8
    nb_actions = 4
    hidden1 = 64
    hidden2 = 32

    key = jax.random.PRNGKey(0)
    k_x, k_a, k11, k12, k2, k3 = jax.random.split(key, 6)

    x = jax.random.normal(k_x, (batch, nb_states), jnp.float32)
    a = jax.random.normal(k_a, (batch, nb_actions), jnp.float32)

    w11, b11 = init_linear(k11, nb_states, hidden1)
    w12, b12 = init_linear(k12, nb_actions, hidden1)
    w2, b2 = init_linear(k2, hidden1, hidden2)
    w3, b3 = init_linear(k3, hidden2, 1)
    params = (w11, b11, w12, b12, w2, b2, w3, b3)

    prepared = prepare_params(params)          # one-time fusion, outside forward
    out = critic_forward(x, a, prepared)
    out = jax.block_until_ready(out)

    ref = reference_forward(x, a, params)
    assert out.shape == (batch, 1), out.shape
    assert jnp.allclose(out, ref, atol=1e-5, rtol=1e-4), (out, ref)

    print("KERNEL_OK")
</pallas_src>

<mosaic_0001>
module attributes {stable_mosaic.version = 11 : i64} {
  func.func @critic_kernel(%arg0: i32, %arg1: memref<128x8xf32, #tpu.memory_space<vmem>>, %arg2: memref<128x4xf32, #tpu.memory_space<vmem>>, %arg3: memref<8x64xf32, #tpu.memory_space<vmem>>, %arg4: memref<4x64xf32, #tpu.memory_space<vmem>>, %arg5: memref<1x64xf32, #tpu.memory_space<vmem>>, %arg6: memref<64x32xf32, #tpu.memory_space<vmem>>, %arg7: memref<1x32xf32, #tpu.memory_space<vmem>>, %arg8: memref<1x32xf32, #tpu.memory_space<vmem>>, %arg9: memref<1x1xf32, #tpu.memory_space<smem>>, %arg10: memref<1x128xf32, #tpu.memory_space<vmem>>) attributes {dimension_semantics = [#tpu.dimension_semantics<parallel>], iteration_bounds = array<i64: 1>, scalar_prefetch = 0 : i64, scratch_operands = 0 : i64, tpu.core_type = #tpu.core_type<tc>, window_params = [{transform_indices = @transform_0, window_bounds = array<i64: 128, 8>}, {transform_indices = @transform_1, window_bounds = array<i64: 128, 4>}, {pipeline_mode = #tpu.pipeline_mode<synchronous>, transform_indices = @transform_2, window_bounds = array<i64: 8, 64>}, {pipeline_mode = #tpu.pipeline_mode<synchronous>, transform_indices = @transform_3, window_bounds = array<i64: 4, 64>}, {pipeline_mode = #tpu.pipeline_mode<synchronous>, transform_indices = @transform_4, window_bounds = array<i64: 1, 64>}, {pipeline_mode = #tpu.pipeline_mode<synchronous>, transform_indices = @transform_5, window_bounds = array<i64: 64, 32>}, {pipeline_mode = #tpu.pipeline_mode<synchronous>, transform_indices = @transform_6, window_bounds = array<i64: 1, 32>}, {pipeline_mode = #tpu.pipeline_mode<synchronous>, transform_indices = @transform_7, window_bounds = array<i64: 1, 32>}, {transform_indices = @transform_8, window_bounds = array<i64: 1, 1>}, {transform_indices = @transform_9, window_bounds = array<i64: 1, 128>}]} {
    %c0 = arith.constant 0 : index
    %c0_0 = arith.constant 0 : index
    %0 = vector.load %arg1[%c0, %c0_0] : memref<128x8xf32, #tpu.memory_space<vmem>>, vector<128x8xf32>
    %c0_1 = arith.constant 0 : index
    %c0_2 = arith.constant 0 : index
    %1 = vector.load %arg3[%c0_1, %c0_2] : memref<8x64xf32, #tpu.memory_space<vmem>>, vector<8x64xf32>
    %cst = arith.constant dense<0.000000e+00> : vector<128x64xf32>
    %2 = tpu.matmul %0, %1, %cst {dimension_numbers = #tpu.dot_dimension_numbers<[1], [0], [0], [1], [0, 0, 1, 1], [], []>} : vector<128x8xf32>, vector<8x64xf32>, vector<128x64xf32> -> vector<128x64xf32>
    %c0_3 = arith.constant 0 : index
    %c0_4 = arith.constant 0 : index
    %3 = vector.load %arg2[%c0_3, %c0_4] : memref<128x4xf32, #tpu.memory_space<vmem>>, vector<128x4xf32>
    %c0_5 = arith.constant 0 : index
    %c0_6 = arith.constant 0 : index
    %4 = vector.load %arg4[%c0_5, %c0_6] : memref<4x64xf32, #tpu.memory_space<vmem>>, vector<4x64xf32>
    %cst_7 = arith.constant dense<0.000000e+00> : vector<128x64xf32>
    %5 = tpu.matmul %3, %4, %cst_7 {dimension_numbers = #tpu.dot_dimension_numbers<[1], [0], [0], [1], [0, 0, 1, 1], [], []>} : vector<128x4xf32>, vector<4x64xf32>, vector<128x64xf32> -> vector<128x64xf32>
    %6 = arith.addf %2, %5 : vector<128x64xf32>
    %c0_8 = arith.constant 0 : index
    %c0_9 = arith.constant 0 : index
    %7 = vector.load %arg5[%c0_8, %c0_9] : memref<1x64xf32, #tpu.memory_space<vmem>>, vector<1x64xf32>
    %8 = vector.broadcast %7 : vector<1x64xf32> to vector<128x64xf32>
    %9 = arith.addf %6, %8 : vector<128x64xf32>
    %cst_10 = arith.constant 0.000000e+00 : f32
    %10 = vector.broadcast %cst_10 : f32 to vector<128x64xf32>
    %11 = arith.maximumf %9, %10 : vector<128x64xf32>
    %c0_11 = arith.constant 0 : index
    %c0_12 = arith.constant 0 : index
    %12 = vector.load %arg6[%c0_11, %c0_12] : memref<64x32xf32, #tpu.memory_space<vmem>>, vector<64x32xf32>
    %cst_13 = arith.constant dense<0.000000e+00> : vector<128x32xf32>
    %13 = tpu.matmul %11, %12, %cst_13 {dimension_numbers = #tpu.dot_dimension_numbers<[1], [0], [0], [1], [0, 0, 1, 1], [], []>} : vector<128x64xf32>, vector<64x32xf32>, vector<128x32xf32> -> vector<128x32xf32>
    %c0_14 = arith.constant 0 : index
    %c0_15 = arith.constant 0 : index
    %14 = vector.load %arg7[%c0_14, %c0_15] : memref<1x32xf32, #tpu.memory_space<vmem>>, vector<1x32xf32>
    %15 = vector.broadcast %14 : vector<1x32xf32> to vector<128x32xf32>
    %16 = arith.addf %13, %15 : vector<128x32xf32>
    %cst_16 = arith.constant 0.000000e+00 : f32
    %17 = vector.broadcast %cst_16 : f32 to vector<128x32xf32>
    %18 = arith.maximumf %16, %17 : vector<128x32xf32>
    %c0_17 = arith.constant 0 : index
    %c0_18 = arith.constant 0 : index
    %19 = vector.load %arg8[%c0_17, %c0_18] : memref<1x32xf32, #tpu.memory_space<vmem>>, vector<1x32xf32>
    %20 = vector.broadcast %19 : vector<1x32xf32> to vector<128x32xf32>
    %21 = arith.mulf %18, %20 : vector<128x32xf32>
    %cst_19 = arith.constant dense<0.000000e+00> : vector<128xf32>
    %22 = vector.multi_reduction <add>, %21, %cst_19 [1] : vector<128x32xf32> to vector<128xf32>
    %23 = vector.shape_cast %22 : vector<128xf32> to vector<128x1xf32>
    %c0_20 = arith.constant 0 : index
    %c0_21 = arith.constant 0 : index
    %24 = memref.load %arg9[%c0_20, %c0_21] : memref<1x1xf32, #tpu.memory_space<smem>>
    %25 = vector.broadcast %24 : f32 to vector<128x1xf32>
    %26 = arith.addf %23, %25 : vector<128x1xf32>
    %27 = vector.shape_cast %26 : vector<128x1xf32> to vector<1x128xf32>
    %c0_22 = arith.constant 0 : index
    %c0_23 = arith.constant 0 : index
    %28 = vector.load %arg10[%c0_22, %c0_23] : memref<1x128xf32, #tpu.memory_space<vmem>>, vector<1x128xf32>
    tpu.vector_store %arg10[%c0_22, %c0_23], %27 {strides = array<i32>} : memref<1x128xf32, #tpu.memory_space<vmem>>, vector<1x128xf32>,
    return
  }
  func.func @transform_0(%arg0: i32) -> (i32, i32) {
    %c0_i32 = arith.constant 0 : i32
    %c0_i32_0 = arith.constant 0 : i32
    return %arg0, %c0_i32 : i32, i32
  }
  func.func @transform_1(%arg0: i32) -> (i32, i32) {
    %c0_i32 = arith.constant 0 : i32
    %c0_i32_0 = arith.constant 0 : i32
    return %arg0, %c0_i32 : i32, i32
  }
  func.func @transform_2(%arg0: i32) -> (i32, i32) {
    %c0_i32 = arith.constant 0 : i32
    %c0_i32_0 = arith.constant 0 : i32
    %c0_i32_1 = arith.constant 0 : i32
    return %c0_i32, %c0_i32_0 : i32, i32
  }
  func.func @transform_3(%arg0: i32) -> (i32, i32) {
    %c0_i32 = arith.constant 0 : i32
    %c0_i32_0 = arith.constant 0 : i32
    %c0_i32_1 = arith.constant 0 : i32
    return %c0_i32, %c0_i32_0 : i32, i32
  }
  func.func @transform_4(%arg0: i32) -> (i32, i32) {
    %c0_i32 = arith.constant 0 : i32
    %c0_i32_0 = arith.constant 0 : i32
    %c0_i32_1 = arith.constant 0 : i32
    return %c0_i32, %c0_i32_0 : i32, i32
  }
  func.func @transform_5(%arg0: i32) -> (i32, i32) {
    %c0_i32 = arith.constant 0 : i32
    %c0_i32_0 = arith.constant 0 : i32
    %c0_i32_1 = arith.constant 0 : i32
    return %c0_i32, %c0_i32_0 : i32, i32
  }
  func.func @transform_6(%arg0: i32) -> (i32, i32) {
    %c0_i32 = arith.constant 0 : i32
    %c0_i32_0 = arith.constant 0 : i32
    %c0_i32_1 = arith.constant 0 : i32
    return %c0_i32, %c0_i32_0 : i32, i32
  }
  func.func @transform_7(%arg0: i32) -> (i32, i32) {
    %c0_i32 = arith.constant 0 : i32
    %c0_i32_0 = arith.constant 0 : i32
    %c0_i32_1 = arith.constant 0 : i32
    return %c0_i32, %c0_i32_0 : i32, i32
  }
  func.func @transform_8(%arg0: i32) -> (i32, i32) {
    %c0_i32 = arith.constant 0 : i32
    %c0_i32_0 = arith.constant 0 : i32
    %c0_i32_1 = arith.constant 0 : i32
    return %c0_i32, %c0_i32_0 : i32, i32
  }
  func.func @transform_9(%arg0: i32) -> (i32, i32) {
    %c0_i32 = arith.constant 0 : i32
    %c0_i32_0 = arith.constant 0 : i32
    return %c0_i32, %arg0 : i32, i32
  }
}

</mosaic_0001>

<llo_original>
// kernel: tpu_custom_call.1
$region0: #{tpu_custom_call.1}
  #allocation0 [shape = 'u32[]', space=smem, size = 0x4, offset = 0x4, fixed_abs, tag = 'smem constant byte address 0x4 - core index']
  #allocation1 [shape = 'u32[72,128]{1,0:T(1,128)}', space=vmem, size = 0x9000, scoped, tag = 'internal scratch']
  #allocation2 [shape = 'f32[1,1]{1,0:T(1,128)S(6)}', space=smem, size = 0x200, scoped, tag = 'scoped memory for tpu_custom_call.1']
  %s0 = inlined_call_operand.vmem [shape: f32[128,8], index: 0, kind: input, shape index: {}]
  %s1 = inlined_call_operand.vmem [shape: f32[128,4], index: 1, kind: input, shape index: {}]
  %s2 = inlined_call_operand.vmem [shape: f32[8,64], index: 2, kind: input, shape index: {}]
  %s3 = inlined_call_operand.vmem [shape: f32[4,64], index: 3, kind: input, shape index: {}]
  %s4 = inlined_call_operand.vmem [shape: f32[1,64], index: 4, kind: input, shape index: {}]
  %s5 = inlined_call_operand.vmem [shape: f32[64,32], index: 5, kind: input, shape index: {}]
  %s6 = inlined_call_operand.vmem [shape: f32[1,32], index: 6, kind: input, shape index: {}]
  %s7 = inlined_call_operand.vmem [shape: f32[1,32], index: 7, kind: input, shape index: {}]
  %s8 = inlined_call_operand.<no memory space> [shape: f32[1,1], index: 8, kind: input, shape index: {}]
  %s9 = inlined_call_operand.hbm [shape: f32[1,128], index: 9, kind: output, shape index: {}]
  %s10 = sld [smem:[#allocation0]]
  $region46: #{tpu_custom_call.1} parent=0
    _
  %s12 = ssub.s32 1, %s10
  %s13 = scalar_select 0, %s12, %s10
  %14 = sst [smem:[#allocation2]] %s8
  $region1: #{tpu_custom_call.1} parent=0
    #allocation3 [shape = 'u8[512]{0}', space=vmem, size = 0x400, scoped, tag = 'output window, operand 0, single buffered']
    #allocation4 [shape = 's32[1]{0}', space=sflag, size = 0x4, scoped, tag = 'scoped memory for tpu_custom_call.1']
    %15 = vsyncpa [#allocation4], 0
    // Predicated region
    $region2: #{tpu_custom_call.1} parent=1 // pred_check
      _
    $region3: #{tpu_custom_call.1} parent=1 // pred_check_branch
      %17 = sbr.rel (0) target = $region5
    $region4: #{tpu_custom_call.1} parent=1 // pred_region
      _
    $region5: #{tpu_custom_call.1} parent=1 // pred_fallthru
      _
    // Predicated region
    $region6: #{tpu_custom_call.1} parent=1 // pred_check
      _
    $region7: #{tpu_custom_call.1} parent=1 // pred_check_branch
      %19 = sbr.rel (0) target = $region9
    $region8: #{tpu_custom_call.1} parent=1 // pred_region
      _
    $region9: #{tpu_custom_call.1} parent=1 // pred_fallthru
      _
    // Predicated region
    $region10: #{tpu_custom_call.1} parent=1 // pred_check
      _
    $region11: #{tpu_custom_call.1} parent=1 // pred_check_branch
      %21 = sbr.rel (0) target = $region13
    $region12: #{tpu_custom_call.1} parent=1 // pred_region
      _
    $region13: #{tpu_custom_call.1} parent=1 // pred_fallthru
      _
    // Predicated region
    $region14: #{tpu_custom_call.1} parent=1 // pred_check
      _
    $region15: #{tpu_custom_call.1} parent=1 // pred_check_branch
      %23 = sbr.rel (0) target = $region17
    $region16: #{tpu_custom_call.1} parent=1 // pred_region
      _
    $region17: #{tpu_custom_call.1} parent=1 // pred_fallthru
      _
    // Predicated region
    $region18: #{tpu_custom_call.1} parent=1 // pred_check
      _
    $region19: #{tpu_custom_call.1} parent=1 // pred_check_branch
      %25 = sbr.rel (0) target = $region21
    $region20: #{tpu_custom_call.1} parent=1 // pred_region
      _
    $region21: #{tpu_custom_call.1} parent=1 // pred_fallthru
      _
    // Predicated region
    $region22: #{tpu_custom_call.1} parent=1 // pred_check
      _
    $region23: #{tpu_custom_call.1} parent=1 // pred_check_branch
      %27 = sbr.rel (0) target = $region25
    $region24: #{tpu_custom_call.1} parent=1 // pred_region
      _
    $region25: #{tpu_custom_call.1} parent=1 // pred_fallthru
      _
    // Predicated region
    $region26: #{tpu_custom_call.1} parent=1 // pred_check
      _
    $region27: #{tpu_custom_call.1} parent=1 // pred_check_branch
      %29 = sbr.rel (0) target = $region29
    $region28: #{tpu_custom_call.1} parent=1 // pred_region
      _
    $region29: #{tpu_custom_call.1} parent=1 // pred_fallthru
      _
    // Predicated region
    $region30: #{tpu_custom_call.1} parent=1 // pred_check
      _
    $region31: #{tpu_custom_call.1} parent=1 // pred_check_branch
      %31 = sbr.rel (0) target = $region33
    $region32: #{tpu_custom_call.1} parent=1 // pred_region
      _
    $region33: #{tpu_custom_call.1} parent=1 // pred_fallthru
      _
    // Predicated region
    $region34: #{tpu_custom_call.1} parent=1 // pred_check
      _
    $region35: #{tpu_custom_call.1} parent=1 // pred_check_branch
      %33 = sbr.rel (0) target = $region37
    $region36: #{tpu_custom_call.1} parent=1 // pred_region
      _
    $region37: #{tpu_custom_call.1} parent=1 // pred_fallthru
      _
    %v34 = vld [vmem:[%s0] sm:$0xff]
    %v35 = vld [vmem:[%s0 + $0x8] sm:$0xff]
    %v36 = vld [vmem:[%s0 + $0x10] sm:$0xff]
    %v37 = vld [vmem:[%s0 + $0x18] sm:$0xff]
    %v38 = vld [vmem:[%s0 + $0x20] sm:$0xff]
    %v39 = vld [vmem:[%s0 + $0x28] sm:$0xff]
    %v40 = vld [vmem:[%s0 + $0x30] sm:$0xff]
    %v41 = vld [vmem:[%s0 + $0x38] sm:$0xff]
    %v42 = vld [vmem:[%s0 + $0x40] sm:$0xff]
    %v43 = vld [vmem:[%s0 + $0x48] sm:$0xff]
    %v44 = vld [vmem:[%s0 + $0x50] sm:$0xff]
    %v45 = vld [vmem:[%s0 + $0x58] sm:$0xff]
    %v46 = vld [vmem:[%s0 + $0x60] sm:$0xff]
    %v47 = vld [vmem:[%s0 + $0x68] sm:$0xff]
    %v48 = vld [vmem:[%s0 + $0x70] sm:$0xff]
    %v49 = vld [vmem:[%s0 + $0x78] sm:$0xff]
    %v50 = vld [vmem:[%s2] sm:$0xff]
    %v51 = vld [vmem:[%s1] sm:$0xff]
    %v52 = vld [vmem:[%s1 + $0x8] sm:$0xff]
    %v53 = vld [vmem:[%s1 + $0x10] sm:$0xff]
    %v54 = vld [vmem:[%s1 + $0x18] sm:$0xff]
    %v55 = vld [vmem:[%s1 + $0x20] sm:$0xff]
    %v56 = vld [vmem:[%s1 + $0x28] sm:$0xff]
    %v57 = vld [vmem:[%s1 + $0x30] sm:$0xff]
    %v58 = vld [vmem:[%s1 + $0x38] sm:$0xff]
    %v59 = vld [vmem:[%s1 + $0x40] sm:$0xff]
    %v60 = vld [vmem:[%s1 + $0x48] sm:$0xff]
    %v61 = vld [vmem:[%s1 + $0x50] sm:$0xff]
    %v62 = vld [vmem:[%s1 + $0x58] sm:$0xff]
    %v63 = vld [vmem:[%s1 + $0x60] sm:$0xff]
    %v64 = vld [vmem:[%s1 + $0x68] sm:$0xff]
    %v65 = vld [vmem:[%s1 + $0x70] sm:$0xff]
    %v66 = vld [vmem:[%s1 + $0x78] sm:$0xff]
    %v67 = vld [vmem:[%s3] sm:$0xf]
    %vm68 = vcmask 31744
    %v70 = vsel %vm68, %v51, 0
    %v73 = vsel %vm68, %v52, 0
    %v76 = vsel %vm68, %v53, 0
    %v79 = vsel %vm68, %v54, 0
    %v82 = vsel %vm68, %v55, 0
    %v85 = vsel %vm68, %v56, 0
    %v88 = vsel %vm68, %v57, 0
    %v91 = vsel %vm68, %v58, 0
    %v94 = vsel %vm68, %v59, 0
    %v97 = vsel %vm68, %v60, 0
    %v100 = vsel %vm68, %v61, 0
    %v103 = vsel %vm68, %v62, 0
    %v106 = vsel %vm68, %v63, 0
    %v109 = vsel %vm68, %v64, 0
    %v112 = vsel %vm68, %v65, 0
    %v115 = vsel %vm68, %v66, 0
    %vm117 = vcmask 1043456
    %v119 = vsel %vm117, %v67, 0
    %121 = vmatpush.msra.mxu0 0.0
    %122 = vmatpush.msra.mxu0 0.0
    %123 = vmatpush.msra.mxu0 0.0
    %124 = vmatpush.msra.mxu0 0.0
    %125 = vmatpush.msra.mxu0 0.0
    %126 = vmatpush.msra.mxu0 0.0
    %127 = vmatpush.msra.mxu0 0.0
    %128 = vmatpush.msra.mxu0 0.0
    %129 = vmatpush.msra.mxu0 0.0
    %130 = vmatpush.msra.mxu0 0.0
    %131 = vmatpush.msra.mxu0 0.0
    %132 = vmatpush.msra.mxu0 0.0
    %133 = vmatpush.msra.mxu0 0.0
    %134 = vmatpush.msra.mxu0 0.0
    %135 = vmatpush.msra.mxu0 0.0
    %136 = vmatpush.msra.mxu0 %v119
    %137 = vmatmul.f32.gmra.mxu0 %v70
    %v138 = vpop.f32.mrf.mxu0
    %v139 = vadd.f32 0.0, %v138
    %140 = vmatmul.f32.gmra.mxu0 %v73
    %v141 = vpop.f32.mrf.mxu0
    %v142 = vadd.f32 0.0, %v141
    %143 = vmatmul.f32.gmra.mxu0 %v76
    %v144 = vpop.f32.mrf.mxu0
    %v145 = vadd.f32 0.0, %v144
    %146 = vmatmul.f32.gmra.mxu0 %v79
    %v147 = vpop.f32.mrf.mxu0
    %v148 = vadd.f32 0.0, %v147
    %149 = vmatmul.f32.gmra.mxu0 %v82
    %v150 = vpop.f32.mrf.mxu0
    %v151 = vadd.f32 0.0, %v150
    %152 = vmatmul.f32.gmra.mxu0 %v85
    %v153 = vpop.f32.mrf.mxu0
    %v154 = vadd.f32 0.0, %v153
    %155 = vmatmul.f32.gmra.mxu0 %v88
    %v156 = vpop.f32.mrf.mxu0
    %v157 = vadd.f32 0.0, %v156
    %158 = vmatmul.f32.gmra.mxu0 %v91
    %v159 = vpop.f32.mrf.mxu0
    %v160 = vadd.f32 0.0, %v159
    %161 = vmatmul.f32.gmra.mxu0 %v94
    %v162 = vpop.f32.mrf.mxu0
    %v163 = vadd.f32 0.0, %v162
    %164 = vmatmul.f32.gmra.mxu0 %v97
    %v165 = vpop.f32.mrf.mxu0
    %v166 = vadd.f32 0.0, %v165
    %167 = vmatmul.f32.gmra.mxu0 %v100
    %v168 = vpop.f32.mrf.mxu0
    %v169 = vadd.f32 0.0, %v168
    %170 = vmatmul.f32.gmra.mxu0 %v103
    %v171 = vpop.f32.mrf.mxu0
    %v172 = vadd.f32 0.0, %v171
    %173 = vmatmul.f32.gmra.mxu0 %v106
    %v174 = vpop.f32.mrf.mxu0
    %v175 = vadd.f32 0.0, %v174
    %176 = vmatmul.f32.gmra.mxu0 %v109
    %v177 = vpop.f32.mrf.mxu0
    %v178 = vadd.f32 0.0, %v177
    %179 = vmatmul.f32.gmra.mxu0 %v112
    %v180 = vpop.f32.mrf.mxu0
    %v181 = vadd.f32 0.0, %v180
    %182 = vmatmul.f32.gmra.mxu0 %v115
    %v183 = vpop.f32.mrf.mxu0
    %v184 = vadd.f32 0.0, %v183
    %185 = vdwg.mxu0
    %vm186 = vcmask 64512
    %v188 = vsel %vm186, %v34, 0
    %v191 = vsel %vm186, %v35, 0
    %v194 = vsel %vm186, %v36, 0
    %v197 = vsel %vm186, %v37, 0
    %v200 = vsel %vm186, %v38, 0
    %v203 = vsel %vm186, %v39, 0
    %v206 = vsel %vm186, %v40, 0
    %v209 = vsel %vm186, %v41, 0
    %v212 = vsel %vm186, %v42, 0
    %v215 = vsel %vm186, %v43, 0
    %v218 = vsel %vm186, %v44, 0
    %v221 = vsel %vm186, %v45, 0
    %v224 = vsel %vm186, %v46, 0
    %v227 = vsel %vm186, %v47, 0
    %v230 = vsel %vm186, %v48, 0
    %v233 = vsel %vm186, %v49, 0
    %235 = vmatpush.msra.mxu0 0.0
    %236 = vmatpush.msra.mxu0 0.0
    %237 = vmatpush.msra.mxu0 0.0
    %238 = vmatpush.msra.mxu0 0.0
    %239 = vmatpush.msra.mxu0 0.0
    %240 = vmatpush.msra.mxu0 0.0
    %241 = vmatpush.msra.mxu0 0.0
    %242 = vmatpush.msra.mxu0 0.0
    %243 = vmatpush.msra.mxu0 0.0
    %244 = vmatpush.msra.mxu0 0.0
    %245 = vmatpush.msra.mxu0 0.0
    %246 = vmatpush.msra.mxu0 0.0
    %247 = vmatpush.msra.mxu0 0.0
    %248 = vmatpush.msra.mxu0 0.0
    %249 = vmatpush.msra.mxu0 0.0
    %250 = vmatpush.msra.mxu0 %v50
    %251 = vmatmul.f32.gmra.mxu0 %v188
    %v252 = vpop.f32.mrf.mxu0
    %v253 = vadd.f32 %v139, %v252
    %254 = vmatmul.f32.gmra.mxu0 %v191
    %v255 = vpop.f32.mrf.mxu0
    %v256 = vadd.f32 %v142, %v255
    %257 = vmatmul.f32.gmra.mxu0 %v194
    %v258 = vpop.f32.mrf.mxu0
    %v259 = vadd.f32 %v145, %v258
    %260 = vmatmul.f32.gmra.mxu0 %v197
    %v261 = vpop.f32.mrf.mxu0
    %v262 = vadd.f32 %v148, %v261
    %263 = vmatmul.f32.gmra.mxu0 %v200
    %v264 = vpop.f32.mrf.mxu0
    %v265 = vadd.f32 %v151, %v264
    %266 = vmatmul.f32.gmra.mxu0 %v203
    %v267 = vpop.f32.mrf.mxu0
    %v268 = vadd.f32 %v154, %v267
    %269 = vmatmul.f32.gmra.mxu0 %v206
    %v270 = vpop.f32.mrf.mxu0
    %v271 = vadd.f32 %v157, %v270
    %272 = vmatmul.f32.gmra.mxu0 %v209
    %v273 = vpop.f32.mrf.mxu0
    %v274 = vadd.f32 %v160, %v273
    %275 = vmatmul.f32.gmra.mxu0 %v212
    %v276 = vpop.f32.mrf.mxu0
    %v277 = vadd.f32 %v163, %v276
    %278 = vmatmul.f32.gmra.mxu0 %v215
    %v279 = vpop.f32.mrf.mxu0
    %v280 = vadd.f32 %v166, %v279
    %281 = vmatmul.f32.gmra.mxu0 %v218
    %v282 = vpop.f32.mrf.mxu0
    %v283 = vadd.f32 %v169, %v282
    %284 = vmatmul.f32.gmra.mxu0 %v221
    %v285 = vpop.f32.mrf.mxu0
    %v286 = vadd.f32 %v172, %v285
    %287 = vmatmul.f32.gmra.mxu0 %v224
    %v288 = vpop.f32.mrf.mxu0
    %v289 = vadd.f32 %v175, %v288
    %290 = vmatmul.f32.gmra.mxu0 %v227
    %v291 = vpop.f32.mrf.mxu0
    %v292 = vadd.f32 %v178, %v291
    %293 = vmatmul.f32.gmra.mxu0 %v230
    %v294 = vpop.f32.mrf.mxu0
    %v295 = vadd.f32 %v181, %v294
    %296 = vmatmul.f32.gmra.mxu0 %v233
    %v297 = vpop.f32.mrf.mxu0
    %v298 = vadd.f32 %v184, %v297
    %299 = vdwg.mxu0
    %v300 = vld [vmem:[%s4] sm:$0x1]
    %v302 = vperm.slane %v300, 0
    %v304 = vadd.f32 %v253, %v302
    %v305 = vadd.f32 %v256, %v302
    %v306 = vadd.f32 %v259, %v302
    %v307 = vadd.f32 %v262, %v302
    %v308 = vadd.f32 %v265, %v302
    %v309 = vadd.f32 %v268, %v302
    %v310 = vadd.f32 %v271, %v302
    %v311 = vadd.f32 %v274, %v302
    %v312 = vadd.f32 %v277, %v302
    %v313 = vadd.f32 %v280, %v302
    %v314 = vadd.f32 %v283, %v302
    %v315 = vadd.f32 %v286, %v302
    %v316 = vadd.f32 %v289, %v302
    %v317 = vadd.f32 %v292, %v302
    %v318 = vadd.f32 %v295, %v302
    %v319 = vadd.f32 %v298, %v302
    %v320 = vmax.f32 %v304, 0.0
    %v321 = vmax.f32 %v305, 0.0
    %v322 = vmax.f32 %v306, 0.0
    %v323 = vmax.f32 %v307, 0.0
    %v324 = vmax.f32 %v308, 0.0
    %v325 = vmax.f32 %v309, 0.0
    %v326 = vmax.f32 %v310, 0.0
    %v327 = vmax.f32 %v311, 0.0
    %v328 = vmax.f32 %v312, 0.0
    %v329 = vmax.f32 %v313, 0.0
    %v330 = vmax.f32 %v314, 0.0
    %v331 = vmax.f32 %v315, 0.0
    %v332 = vmax.f32 %v316, 0.0
    %v333 = vmax.f32 %v317, 0.0
    %v334 = vmax.f32 %v318, 0.0
    %v335 = vmax.f32 %v319, 0.0
    %v336 = vld [vmem:[%s5] sm:$0xff]
    %v337 = vld [vmem:[%s5 + $0x8] sm:$0xff]
    %v338 = vld [vmem:[%s5 + $0x10] sm:$0xff]
    %v339 = vld [vmem:[%s5 + $0x18] sm:$0xff]
    %v340 = vld [vmem:[%s5 + $0x20] sm:$0xff]
    %v341 = vld [vmem:[%s5 + $0x28] sm:$0xff]
    %v342 = vld [vmem:[%s5 + $0x30] sm:$0xff]
    %v343 = vld [vmem:[%s5 + $0x38] sm:$0xff]
    %v344 = vld [vmem:[%s6] sm:$0x1]
    %v346 = vperm.slane %v344, 0
    %vm348 = vcmask 523264
    %v350 = vsel %vm348, %v320, 0
    %v353 = vsel %vm348, %v321, 0
    %v356 = vsel %vm348, %v322, 0
    %v359 = vsel %vm348, %v323, 0
    %v362 = vsel %vm348, %v324, 0
    %v365 = vsel %vm348, %v325, 0
    %v368 = vsel %vm348, %v326, 0
    %v371 = vsel %vm348, %v327, 0
    %v374 = vsel %vm348, %v328, 0
    %v377 = vsel %vm348, %v329, 0
    %v380 = vsel %vm348, %v330, 0
    %v383 = vsel %vm348, %v331, 0
    %v386 = vsel %vm348, %v332, 0
    %v389 = vsel %vm348, %v333, 0
    %v392 = vsel %vm348, %v334, 0
    %v395 = vsel %vm348, %v335, 0
    %397 = vmatpush.msra.mxu0 0.0
    %398 = vmatpush.msra.mxu0 0.0
    %399 = vmatpush.msra.mxu0 0.0
    %400 = vmatpush.msra.mxu0 0.0
    %401 = vmatpush.msra.mxu0 0.0
    %402 = vmatpush.msra.mxu0 0.0
    %403 = vmatpush.msra.mxu0 0.0
    %404 = vmatpush.msra.mxu0 0.0
    %405 = vmatpush.msra.mxu0 %v343
    %406 = vmatpush.msra.mxu0 %v342
    %407 = vmatpush.msra.mxu0 %v341
    %408 = vmatpush.msra.mxu0 %v340
    %409 = vmatpush.msra.mxu0 %v339
    %410 = vmatpush.msra.mxu0 %v338
    %411 = vmatpush.msra.mxu0 %v337
    %412 = vmatpush.msra.mxu0 %v336
    %413 = vmatmul.f32.gmra.mxu0 %v350
    %v414 = vpop.f32.mrf.mxu0
    %v415 = vadd.f32 %v346, %v414
    %416 = vmatmul.f32.gmra.mxu0 %v353
    %v417 = vpop.f32.mrf.mxu0
    %v418 = vadd.f32 %v346, %v417
    %419 = vmatmul.f32.gmra.mxu0 %v356
    %v420 = vpop.f32.mrf.mxu0
    %v421 = vadd.f32 %v346, %v420
    %422 = vmatmul.f32.gmra.mxu0 %v359
    %v423 = vpop.f32.mrf.mxu0
    %v424 = vadd.f32 %v346, %v423
    %425 = vmatmul.f32.gmra.mxu0 %v362
    %v426 = vpop.f32.mrf.mxu0
    %v427 = vadd.f32 %v346, %v426
    %428 = vmatmul.f32.gmra.mxu0 %v365
    %v429 = vpop.f32.mrf.mxu0
    %v430 = vadd.f32 %v346, %v429
    %431 = vmatmul.f32.gmra.mxu0 %v368
    %v432 = vpop.f32.mrf.mxu0
    %v433 = vadd.f32 %v346, %v432
    %434 = vmatmul.f32.gmra.mxu0 %v371
    %v435 = vpop.f32.mrf.mxu0
    %v436 = vadd.f32 %v346, %v435
    %437 = vmatmul.f32.gmra.mxu0 %v374
    %v438 = vpop.f32.mrf.mxu0
    %v439 = vadd.f32 %v346, %v438
    %440 = vmatmul.f32.gmra.mxu0 %v377
    %v441 = vpop.f32.mrf.mxu0
    %v442 = vadd.f32 %v346, %v441
    %443 = vmatmul.f32.gmra.mxu0 %v380
    %v444 = vpop.f32.mrf.mxu0
    %v445 = vadd.f32 %v346, %v444
    %446 = vmatmul.f32.gmra.mxu0 %v383
    %v447 = vpop.f32.mrf.mxu0
    %v448 = vadd.f32 %v346, %v447
    %449 = vmatmul.f32.gmra.mxu0 %v386
    %v450 = vpop.f32.mrf.mxu0
    %v451 = vadd.f32 %v346, %v450
    %452 = vmatmul.f32.gmra.mxu0 %v389
    %v453 = vpop.f32.mrf.mxu0
    %v454 = vadd.f32 %v346, %v453
    %455 = vmatmul.f32.gmra.mxu0 %v392
    %v456 = vpop.f32.mrf.mxu0
    %v457 = vadd.f32 %v346, %v456
    %458 = vmatmul.f32.gmra.mxu0 %v395
    %v459 = vpop.f32.mrf.mxu0
    %v460 = vadd.f32 %v346, %v459
    %461 = vdwg.mxu0
    %v462 = vmax.f32 %v415, 0.0
    %v463 = vmax.f32 %v418, 0.0
    %v464 = vmax.f32 %v421, 0.0
    %v465 = vmax.f32 %v424, 0.0
    %v466 = vmax.f32 %v427, 0.0
    %v467 = vmax.f32 %v430, 0.0
    %v468 = vmax.f32 %v433, 0.0
    %v469 = vmax.f32 %v436, 0.0
    %v470 = vmax.f32 %v439, 0.0
    %v471 = vmax.f32 %v442, 0.0
    %v472 = vmax.f32 %v445, 0.0
    %v473 = vmax.f32 %v448, 0.0
    %v474 = vmax.f32 %v451, 0.0
    %v475 = vmax.f32 %v454, 0.0
    %v476 = vmax.f32 %v457, 0.0
    %v477 = vmax.f32 %v460, 0.0
    %v478 = vld [vmem:[%s7] sm:$0x1]
    %v480 = vperm.slane %v478, 0
    %v482 = vmul.f32 %v462, %v480
    %v483 = vmul.f32 %v463, %v480
    %v484 = vmul.f32 %v464, %v480
    %v485 = vmul.f32 %v465, %v480
    %v486 = vmul.f32 %v466, %v480
    %v487 = vmul.f32 %v467, %v480
    %v488 = vmul.f32 %v468, %v480
    %v489 = vmul.f32 %v469, %v480
    %v490 = vmul.f32 %v470, %v480
    %v491 = vmul.f32 %v471, %v480
    %v492 = vmul.f32 %v472, %v480
    %v493 = vmul.f32 %v473, %v480
    %v494 = vmul.f32 %v474, %v480
    %v495 = vmul.f32 %v475, %v480
    %v496 = vmul.f32 %v476, %v480
    %v497 = vmul.f32 %v477, %v480
    %vm498 = vcmask 261120
    %v499 = vsel %vm498, %v482, 0.0
    %500 = vadd.xlane.f32.xlu0 %v499
    %v501 = vpop.xlane.xlu0 %500
    %v502 = vsel %vm498, %v483, 0.0
    %503 = vadd.xlane.f32.xlu0 %v502
    %v504 = vpop.xlane.xlu0 %503
    %v505 = vsel %vm498, %v484, 0.0
    %506 = vadd.xlane.f32.xlu0 %v505
    %v507 = vpop.xlane.xlu0 %506
    %v508 = vsel %vm498, %v485, 0.0
    %509 = vadd.xlane.f32.xlu0 %v508
    %v510 = vpop.xlane.xlu0 %509
    %v511 = vsel %vm498, %v486, 0.0
    %512 = vadd.xlane.f32.xlu0 %v511
    %v513 = vpop.xlane.xlu0 %512
    %v514 = vsel %vm498, %v487, 0.0
    %515 = vadd.xlane.f32.xlu0 %v514
    %v516 = vpop.xlane.xlu0 %515
    %v517 = vsel %vm498, %v488, 0.0
    %518 = vadd.xlane.f32.xlu0 %v517
    %v519 = vpop.xlane.xlu0 %518
    %v520 = vsel %vm498, %v489, 0.0
    %521 = vadd.xlane.f32.xlu0 %v520
    %v522 = vpop.xlane.xlu0 %521
    %v523 = vsel %vm498, %v490, 0.0
    %524 = vadd.xlane.f32.xlu0 %v523
    %v525 = vpop.xlane.xlu0 %524
    %v526 = vsel %vm498, %v491, 0.0
    %527 = vadd.xlane.f32.xlu0 %v526
    %v528 = vpop.xlane.xlu0 %527
    %v529 = vsel %vm498, %v492, 0.0
    %530 = vadd.xlane.f32.xlu0 %v529
    %v531 = vpop.xlane.xlu0 %530
    %v532 = vsel %vm498, %v493, 0.0
    %533 = vadd.xlane.f32.xlu0 %v532
    %v534 = vpop.xlane.xlu0 %533
    %v535 = vsel %vm498, %v494, 0.0
    %536 = vadd.xlane.f32.xlu0 %v535
    %v537 = vpop.xlane.xlu0 %536
    %v538 = vsel %vm498, %v495, 0.0
    %539 = vadd.xlane.f32.xlu0 %v538
    %v540 = vpop.xlane.xlu0 %539
    %v541 = vsel %vm498, %v496, 0.0
    %542 = vadd.xlane.f32.xlu0 %v541
    %v543 = vpop.xlane.xlu0 %542
    %v544 = vsel %vm498, %v497, 0.0
    %545 = vadd.xlane.f32.xlu0 %v544
    %v546 = vpop.xlane.xlu0 %545
    %s547 = sld [smem:[#allocation2]]
    %v548 = vstv %s547
    %v549 = vadd.f32 %v501, %v548
    %v550 = vadd.f32 %v504, %v548
    %v551 = vadd.f32 %v507, %v548
    %v552 = vadd.f32 %v510, %v548
    %v553 = vadd.f32 %v513, %v548
    %v554 = vadd.f32 %v516, %v548
    %v555 = vadd.f32 %v519, %v548
    %v556 = vadd.f32 %v522, %v548
    %v557 = vadd.f32 %v525, %v548
    %v558 = vadd.f32 %v528, %v548
    %v559 = vadd.f32 %v531, %v548
    %v560 = vadd.f32 %v534, %v548
    %v561 = vadd.f32 %v537, %v548
    %v562 = vadd.f32 %v540, %v548
    %v563 = vadd.f32 %v543, %v548
    %v564 = vadd.f32 %v546, %v548
    %v581 = vlaneseq
    %v582 = vand.u32 %v581, 127
    %v583 = vperm.slane %v549, %v582
    %v584 = vadd.s32 %v582, 4294967288
    %v585 = vperm.slane %v550, %v584
    %vm586 = vcmask 130112
    %v587 = vsel %vm586, %v585, %v583
    %v588 = vadd.s32 %v582, 4294967280
    %v589 = vperm.slane %v551, %v588
    %vm590 = vcmask 195712
    %v591 = vsel %vm590, %v589, %v587
    %v592 = vadd.s32 %v582, 4294967272
    %v593 = vperm.slane %v552, %v592
    %vm594 = vcmask 261312
    %v595 = vsel %vm594, %v593, %v591
    %v596 = vadd.s32 %v582, 4294967264
    %v597 = vperm.slane %v553, %v596
    %vm598 = vcmask 326912
    %v599 = vsel %vm598, %v597, %v595
    %v600 = vadd.s32 %v582, 4294967256
    %v601 = vperm.slane %v554, %v600
    %vm602 = vcmask 392512
    %v603 = vsel %vm602, %v601, %v599
    %v604 = vadd.s32 %v582, 4294967248
    %v605 = vperm.slane %v555, %v604
    %vm606 = vcmask 458112
    %v607 = vsel %vm606, %v605, %v603
    %v608 = vadd.s32 %v582, 4294967240
    %v609 = vperm.slane %v556, %v608
    %vm610 = vcmask 523712
    %v611 = vsel %vm610, %v609, %v607
    %v612 = vadd.s32 %v582, 4294967232
    %v613 = vperm.slane %v557, %v612
    %vm614 = vcmask 589312
    %v615 = vsel %vm614, %v613, %v611
    %v616 = vadd.s32 %v582, 4294967224
    %v617 = vperm.slane %v558, %v616
    %vm618 = vcmask 654912
    %v619 = vsel %vm618, %v617, %v615
    %v620 = vadd.s32 %v582, 4294967216
    %v621 = vperm.slane %v559, %v620
    %vm622 = vcmask 720512
    %v623 = vsel %vm622, %v621, %v619
    %v624 = vadd.s32 %v582, 4294967208
    %v625 = vperm.slane %v560, %v624
    %vm626 = vcmask 786112
    %v627 = vsel %vm626, %v625, %v623
    %v628 = vadd.s32 %v582, 4294967200
    %v629 = vperm.slane %v561, %v628
    %vm630 = vcmask 851712
    %v631 = vsel %vm630, %v629, %v627
    %v632 = vadd.s32 %v582, 4294967192
    %v633 = vperm.slane %v562, %v632
    %vm634 = vcmask 917312
    %v635 = vsel %vm634, %v633, %v631
    %v636 = vadd.s32 %v582, 4294967184
    %v637 = vperm.slane %v563, %v636
    %vm638 = vcmask 982912
    %v639 = vsel %vm638, %v637, %v635
    %v640 = vadd.s32 %v582, 4294967176
    %v641 = vperm.slane %v564, %v640
    %vm642 = vcmask 1048512
    %v643 = vsel %vm642, %v641, %v639
    %645 = vst [vmem:[#allocation3] sm:$0x1] %v643
    // Predicated region
    $region38: #{tpu_custom_call.1} parent=1 // pred_check
      _
    $region39: #{tpu_custom_call.1} parent=1 // pred_check_branch
      %647 = sbr.rel (0) target = $region41
    $region40: #{tpu_custom_call.1} parent=1 // pred_region
      %649 = vsyncadd [#allocation4], 0
      %s651 = sshll.u32 [#allocation3], 4
      %s652 = int_to_ptr.vmem [resolvable:$true] %s651
      %s653 = sshll.u32 %s9, 4
      %s654 = int_to_ptr.hbm [resolvable:$true] %s653
      %656 = dma.vmem_to_hbm [thread:$0]  %s652, 16, %s654, [#allocation4]
    $region41: #{tpu_custom_call.1} parent=1 // pred_fallthru
      _
    // Predicated region
    $region42: #{tpu_custom_call.1} parent=1 // pred_check
      _
    $region43: #{tpu_custom_call.1} parent=1 // pred_check_branch
      %658 = sbr.rel (0) target = $region45
    $region44: #{tpu_custom_call.1} parent=1 // pred_region
      %660 = dma.done [#allocation4], 16
    $region45: #{tpu_custom_call.1} parent=1 // pred_fallthru
      _
    %661 = vsyncpa [#allocation4], 1

</llo_original>
